<compile_context>
chip_gen: v5e
topology: v5e:2x2
jax: 0.10.0
libtpu: 0.0.40
codegen_flags: <defaults>
</compile_context>

<pallas_src>
import math
import functools

import jax
import jax.numpy as jnp
from jax import lax
from jax.experimental import pallas as pl
from jax.experimental.pallas import tpu as pltpu


def _mha_kernel(q_ref, k_ref, v_ref, o_ref, *, num_heads, head_dim, scale):
    # q_ref/k_ref/v_ref/o_ref: (E, L) VMEM tiles for one batch, L on lanes.
    for h in range(num_heads):             # static (unrolled) loop over heads
        lo = h * head_dim                  # static, sublane-aligned slice offset
        q = q_ref[lo:lo + head_dim, :] * scale          # (Dh, Lq), scale folded into q
        k = k_ref[lo:lo + head_dim, :]                  # (Dh, Lk)
        v = v_ref[lo:lo + head_dim, :]                  # (Dh, Lk)

        # scores^T: (Lk, Lq) — contract over Dh with no explicit transpose.
        s = lax.dot_general(
            k, q, (((0,), (0,)), ((), ())),
            preferred_element_type=jnp.float32)

        # Numerically-stable softmax over the key axis (axis 0 here); the
        # (1, Lq) statistics broadcast along sublanes with no relayout.
        m = jnp.max(s, axis=0, keepdims=True)           # (1, Lq)
        p = jnp.exp(s - m)                              # (Lk, Lq)
        denom = jnp.sum(p, axis=0, keepdims=True)       # (1, Lq)

        # context: (Dh, Lq) = v (Dh, Lk) @ p (Lk, Lq) — plain MXU matmul.
        o = jnp.dot(v, p.astype(v.dtype), preferred_element_type=jnp.float32)

        # Deferred normalization on the small (Dh, Lq) output.
        o = o * pl.reciprocal(denom)
        o_ref[lo:lo + head_dim, :] = o.astype(o_ref.dtype)


def multihead_attention(query, key, value, num_heads):
    """Equivalent of MultiheadAttention.forward with identity projections.

    query/key/value: (B, E, L) float32   # NCL layout
    returns: (B, E, L) float32
    """
    B, E, L = query.shape
    H = num_heads
    Dh = E // H
    assert Dh * H == E, "embed_dim must be divisible by num_heads"
    scale = 1.0 / math.sqrt(Dh)

    kernel = functools.partial(
        _mha_kernel, num_heads=H, head_dim=Dh, scale=scale)

    # One (E, L) slab per batch; last two block dims equal the full array dims,
    # so the (8, 128) divisibility rule does not apply.
    spec = pl.BlockSpec((None, E, L), lambda b: (b, 0, 0))

    itemsize = jnp.dtype(query.dtype).itemsize
    cost = pl.CostEstimate(
        flops=4 * B * H * L * L * Dh,              # QK^T + PV (2 flops / MAC)
        transcendentals=B * H * L * L,             # exp
        bytes_accessed=4 * B * E * L * itemsize)   # q, k, v in + o out

    out = pl.pallas_call(
        kernel,
        out_shape=jax.ShapeDtypeStruct((B, E, L), query.dtype),
        grid=(B,),
        in_specs=[spec, spec, spec],
        out_specs=spec,
        compiler_params=pltpu.CompilerParams(
            dimension_semantics=("parallel",)),
        cost_estimate=cost,
    )(query, key, value)
    return out


def _reference(query, key, value, num_heads):
    """Pure-JAX reference mirroring F.multi_head_attention_forward."""
    B, E, L = query.shape
    H = num_heads
    Dh = E // H

    def to_heads(x):
        return jnp.transpose(x.reshape(B, H, Dh, L), (0, 1, 3, 2))  # (B,H,L,Dh)

    q = to_heads(query) / math.sqrt(Dh)
    k = to_heads(key)
    v = to_heads(value)
    s = jnp.einsum("bhqd,bhkd->bhqk", q, k)
    p = jax.nn.softmax(s, axis=-1)
    o = jnp.einsum("bhqk,bhkd->bhqd", p, v)
    return jnp.transpose(o, (0, 1, 3, 2)).reshape(B, E, L)


if __name__ == "__main__":
    # Small deterministic inputs consistent with the module:
    # embed_dim=32, num_heads=4 (head_dim=8), batch=2, seq_len=8.
    B, E, L, H = 2, 32, 8, 4
    key0 = jax.random.PRNGKey(0)
    kq, kk, kv = jax.random.split(key0, 3)
    query = jax.random.normal(kq, (B, E, L), dtype=jnp.float32)
    key_ = jax.random.normal(kk, (B, E, L), dtype=jnp.float32)
    value = jax.random.normal(kv, (B, E, L), dtype=jnp.float32)

    # Module parameters (in_proj = 3x identity, out_proj = identity, biases = 0)
    # make the projections no-ops, so they are folded away here.
    out = multihead_attention(query, key_, value, H)
    out = jax.block_until_ready(out)

    ref = _reference(query, key_, value, H)
    assert out.shape == (B, E, L)
    assert jnp.allclose(out, ref, atol=1e-5, rtol=1e-5)

    print("KERNEL_OK")
</pallas_src>

<mosaic_0001>
module attributes {stable_mosaic.version = 11 : i64} {
  func.func @_mha_kernel(%arg0: i32, %arg1: memref<1x32x8xf32, #tpu.memory_space<vmem>>, %arg2: memref<1x32x8xf32, #tpu.memory_space<vmem>>, %arg3: memref<1x32x8xf32, #tpu.memory_space<vmem>>, %arg4: memref<1x32x8xf32, #tpu.memory_space<vmem>>) attributes {dimension_semantics = [#tpu.dimension_semantics<parallel>], iteration_bounds = array<i64: 2>, scalar_prefetch = 0 : i64, scratch_operands = 0 : i64, tpu.core_type = #tpu.core_type<tc>, window_params = [{transform_indices = @transform_0, window_bounds = array<i64: 1, 32, 8>}, {transform_indices = @transform_1, window_bounds = array<i64: 1, 32, 8>}, {transform_indices = @transform_2, window_bounds = array<i64: 1, 32, 8>}, {transform_indices = @transform_3, window_bounds = array<i64: 1, 32, 8>}]} {
    %c0 = arith.constant 0 : index
    %c0_0 = arith.constant 0 : index
    %c0_1 = arith.constant 0 : index
    %0 = vector.load %arg1[%c0, %c0_0, %c0_1] : memref<1x32x8xf32, #tpu.memory_space<vmem>>, vector<1x8x8xf32>
    %1 = vector.shape_cast %0 : vector<1x8x8xf32> to vector<8x8xf32>
    %cst = arith.constant 0.353553385 : f32
    %2 = vector.broadcast %cst : f32 to vector<8x8xf32>
    %3 = arith.mulf %1, %2 : vector<8x8xf32>
    %c0_2 = arith.constant 0 : index
    %c0_3 = arith.constant 0 : index
    %c0_4 = arith.constant 0 : index
    %4 = vector.load %arg2[%c0_2, %c0_3, %c0_4] : memref<1x32x8xf32, #tpu.memory_space<vmem>>, vector<1x8x8xf32>
    %5 = vector.shape_cast %4 : vector<1x8x8xf32> to vector<8x8xf32>
    %c0_5 = arith.constant 0 : index
    %c0_6 = arith.constant 0 : index
    %c0_7 = arith.constant 0 : index
    %6 = vector.load %arg3[%c0_5, %c0_6, %c0_7] : memref<1x32x8xf32, #tpu.memory_space<vmem>>, vector<1x8x8xf32>
    %7 = vector.shape_cast %6 : vector<1x8x8xf32> to vector<8x8xf32>
    %cst_8 = arith.constant dense<0.000000e+00> : vector<8x8xf32>
    %8 = tpu.matmul %5, %3, %cst_8 {dimension_numbers = #tpu.dot_dimension_numbers<[0], [0], [1], [1], [0, 1, 1, 1], [], []>} : vector<8x8xf32>, vector<8x8xf32>, vector<8x8xf32> -> vector<8x8xf32>
    %cst_9 = arith.constant dense<0xFF800000> : vector<8xf32>
    %9 = vector.multi_reduction <maximumf>, %8, %cst_9 [0] : vector<8x8xf32> to vector<8xf32>
    %10 = vector.shape_cast %9 : vector<8xf32> to vector<1x8xf32>
    %11 = vector.broadcast %10 : vector<1x8xf32> to vector<8x8xf32>
    %12 = arith.subf %8, %11 : vector<8x8xf32>
    %13 = math.exp %12 : vector<8x8xf32>
    %cst_10 = arith.constant dense<0.000000e+00> : vector<8xf32>
    %14 = vector.multi_reduction <add>, %13, %cst_10 [0] : vector<8x8xf32> to vector<8xf32>
    %15 = vector.shape_cast %14 : vector<8xf32> to vector<1x8xf32>
    %cst_11 = arith.constant dense<0.000000e+00> : vector<8x8xf32>
    %16 = tpu.matmul %7, %13, %cst_11 {dimension_numbers = #tpu.dot_dimension_numbers<[1], [0], [0], [1], [0, 0, 1, 1], [], []>} : vector<8x8xf32>, vector<8x8xf32>, vector<8x8xf32> -> vector<8x8xf32>
    %17 = tpu.reciprocal %15 : vector<1x8xf32> -> vector<1x8xf32>
    %18 = vector.broadcast %17 : vector<1x8xf32> to vector<8x8xf32>
    %19 = arith.mulf %16, %18 : vector<8x8xf32>
    %c0_12 = arith.constant 0 : index
    %c0_13 = arith.constant 0 : index
    %c0_14 = arith.constant 0 : index
    %20 = vector.load %arg4[%c0_12, %c0_13, %c0_14] : memref<1x32x8xf32, #tpu.memory_space<vmem>>, vector<1x8x8xf32>
    %21 = vector.shape_cast %20 : vector<1x8x8xf32> to vector<8x8xf32>
    %22 = vector.shape_cast %19 : vector<8x8xf32> to vector<1x8x8xf32>
    tpu.vector_store %arg4[%c0_12, %c0_13, %c0_14], %22 {strides = array<i32>} : memref<1x32x8xf32, #tpu.memory_space<vmem>>, vector<1x8x8xf32>,
    %c0_15 = arith.constant 0 : index
    %c8 = arith.constant 8 : index
    %c0_16 = arith.constant 0 : index
    %23 = vector.load %arg1[%c0_15, %c8, %c0_16] : memref<1x32x8xf32, #tpu.memory_space<vmem>>, vector<1x8x8xf32>
    %24 = vector.shape_cast %23 : vector<1x8x8xf32> to vector<8x8xf32>
    %cst_17 = arith.constant 0.353553385 : f32
    %25 = vector.broadcast %cst_17 : f32 to vector<8x8xf32>
    %26 = arith.mulf %24, %25 : vector<8x8xf32>
    %c0_18 = arith.constant 0 : index
    %c8_19 = arith.constant 8 : index
    %c0_20 = arith.constant 0 : index
    %27 = vector.load %arg2[%c0_18, %c8_19, %c0_20] : memref<1x32x8xf32, #tpu.memory_space<vmem>>, vector<1x8x8xf32>
    %28 = vector.shape_cast %27 : vector<1x8x8xf32> to vector<8x8xf32>
    %c0_21 = arith.constant 0 : index
    %c8_22 = arith.constant 8 : index
    %c0_23 = arith.constant 0 : index
    %29 = vector.load %arg3[%c0_21, %c8_22, %c0_23] : memref<1x32x8xf32, #tpu.memory_space<vmem>>, vector<1x8x8xf32>
    %30 = vector.shape_cast %29 : vector<1x8x8xf32> to vector<8x8xf32>
    %cst_24 = arith.constant dense<0.000000e+00> : vector<8x8xf32>
    %31 = tpu.matmul %28, %26, %cst_24 {dimension_numbers = #tpu.dot_dimension_numbers<[0], [0], [1], [1], [0, 1, 1, 1], [], []>} : vector<8x8xf32>, vector<8x8xf32>, vector<8x8xf32> -> vector<8x8xf32>
    %cst_25 = arith.constant dense<0xFF800000> : vector<8xf32>
    %32 = vector.multi_reduction <maximumf>, %31, %cst_25 [0] : vector<8x8xf32> to vector<8xf32>
    %33 = vector.shape_cast %32 : vector<8xf32> to vector<1x8xf32>
    %34 = vector.broadcast %33 : vector<1x8xf32> to vector<8x8xf32>
    %35 = arith.subf %31, %34 : vector<8x8xf32>
    %36 = math.exp %35 : vector<8x8xf32>
    %cst_26 = arith.constant dense<0.000000e+00> : vector<8xf32>
    %37 = vector.multi_reduction <add>, %36, %cst_26 [0] : vector<8x8xf32> to vector<8xf32>
    %38 = vector.shape_cast %37 : vector<8xf32> to vector<1x8xf32>
    %cst_27 = arith.constant dense<0.000000e+00> : vector<8x8xf32>
    %39 = tpu.matmul %30, %36, %cst_27 {dimension_numbers = #tpu.dot_dimension_numbers<[1], [0], [0], [1], [0, 0, 1, 1], [], []>} : vector<8x8xf32>, vector<8x8xf32>, vector<8x8xf32> -> vector<8x8xf32>
    %40 = tpu.reciprocal %38 : vector<1x8xf32> -> vector<1x8xf32>
    %41 = vector.broadcast %40 : vector<1x8xf32> to vector<8x8xf32>
    %42 = arith.mulf %39, %41 : vector<8x8xf32>
    %c0_28 = arith.constant 0 : index
    %c8_29 = arith.constant 8 : index
    %c0_30 = arith.constant 0 : index
    %43 = vector.load %arg4[%c0_28, %c8_29, %c0_30] : memref<1x32x8xf32, #tpu.memory_space<vmem>>, vector<1x8x8xf32>
    %44 = vector.shape_cast %43 : vector<1x8x8xf32> to vector<8x8xf32>
    %45 = vector.shape_cast %42 : vector<8x8xf32> to vector<1x8x8xf32>
    tpu.vector_store %arg4[%c0_28, %c8_29, %c0_30], %45 {strides = array<i32>} : memref<1x32x8xf32, #tpu.memory_space<vmem>>, vector<1x8x8xf32>,
    %c0_31 = arith.constant 0 : index
    %c16 = arith.constant 16 : index
    %c0_32 = arith.constant 0 : index
    %46 = vector.load %arg1[%c0_31, %c16, %c0_32] : memref<1x32x8xf32, #tpu.memory_space<vmem>>, vector<1x8x8xf32>
    %47 = vector.shape_cast %46 : vector<1x8x8xf32> to vector<8x8xf32>
    %cst_33 = arith.constant 0.353553385 : f32
    %48 = vector.broadcast %cst_33 : f32 to vector<8x8xf32>
    %49 = arith.mulf %47, %48 : vector<8x8xf32>
    %c0_34 = arith.constant 0 : index
    %c16_35 = arith.constant 16 : index
    %c0_36 = arith.constant 0 : index
    %50 = vector.load %arg2[%c0_34, %c16_35, %c0_36] : memref<1x32x8xf32, #tpu.memory_space<vmem>>, vector<1x8x8xf32>
    %51 = vector.shape_cast %50 : vector<1x8x8xf32> to vector<8x8xf32>
    %c0_37 = arith.constant 0 : index
    %c16_38 = arith.constant 16 : index
    %c0_39 = arith.constant 0 : index
    %52 = vector.load %arg3[%c0_37, %c16_38, %c0_39] : memref<1x32x8xf32, #tpu.memory_space<vmem>>, vector<1x8x8xf32>
    %53 = vector.shape_cast %52 : vector<1x8x8xf32> to vector<8x8xf32>
    %cst_40 = arith.constant dense<0.000000e+00> : vector<8x8xf32>
    %54 = tpu.matmul %51, %49, %cst_40 {dimension_numbers = #tpu.dot_dimension_numbers<[0], [0], [1], [1], [0, 1, 1, 1], [], []>} : vector<8x8xf32>, vector<8x8xf32>, vector<8x8xf32> -> vector<8x8xf32>
    %cst_41 = arith.constant dense<0xFF800000> : vector<8xf32>
    %55 = vector.multi_reduction <maximumf>, %54, %cst_41 [0] : vector<8x8xf32> to vector<8xf32>
    %56 = vector.shape_cast %55 : vector<8xf32> to vector<1x8xf32>
    %57 = vector.broadcast %56 : vector<1x8xf32> to vector<8x8xf32>
    %58 = arith.subf %54, %57 : vector<8x8xf32>
    %59 = math.exp %58 : vector<8x8xf32>
    %cst_42 = arith.constant dense<0.000000e+00> : vector<8xf32>
    %60 = vector.multi_reduction <add>, %59, %cst_42 [0] : vector<8x8xf32> to vector<8xf32>
    %61 = vector.shape_cast %60 : vector<8xf32> to vector<1x8xf32>
    %cst_43 = arith.constant dense<0.000000e+00> : vector<8x8xf32>
    %62 = tpu.matmul %53, %59, %cst_43 {dimension_numbers = #tpu.dot_dimension_numbers<[1], [0], [0], [1], [0, 0, 1, 1], [], []>} : vector<8x8xf32>, vector<8x8xf32>, vector<8x8xf32> -> vector<8x8xf32>
    %63 = tpu.reciprocal %61 : vector<1x8xf32> -> vector<1x8xf32>
    %64 = vector.broadcast %63 : vector<1x8xf32> to vector<8x8xf32>
    %65 = arith.mulf %62, %64 : vector<8x8xf32>
    %c0_44 = arith.constant 0 : index
    %c16_45 = arith.constant 16 : index
    %c0_46 = arith.constant 0 : index
    %66 = vector.load %arg4[%c0_44, %c16_45, %c0_46] : memref<1x32x8xf32, #tpu.memory_space<vmem>>, vector<1x8x8xf32>
    %67 = vector.shape_cast %66 : vector<1x8x8xf32> to vector<8x8xf32>
    %68 = vector.shape_cast %65 : vector<8x8xf32> to vector<1x8x8xf32>
    tpu.vector_store %arg4[%c0_44, %c16_45, %c0_46], %68 {strides = array<i32>} : memref<1x32x8xf32, #tpu.memory_space<vmem>>, vector<1x8x8xf32>,
    %c0_47 = arith.constant 0 : index
    %c24 = arith.constant 24 : index
    %c0_48 = arith.constant 0 : index
    %69 = vector.load %arg1[%c0_47, %c24, %c0_48] : memref<1x32x8xf32, #tpu.memory_space<vmem>>, vector<1x8x8xf32>
    %70 = vector.shape_cast %69 : vector<1x8x8xf32> to vector<8x8xf32>
    %cst_49 = arith.constant 0.353553385 : f32
    %71 = vector.broadcast %cst_49 : f32 to vector<8x8xf32>
    %72 = arith.mulf %70, %71 : vector<8x8xf32>
    %c0_50 = arith.constant 0 : index
    %c24_51 = arith.constant 24 : index
    %c0_52 = arith.constant 0 : index
    %73 = vector.load %arg2[%c0_50, %c24_51, %c0_52] : memref<1x32x8xf32, #tpu.memory_space<vmem>>, vector<1x8x8xf32>
    %74 = vector.shape_cast %73 : vector<1x8x8xf32> to vector<8x8xf32>
    %c0_53 = arith.constant 0 : index
    %c24_54 = arith.constant 24 : index
    %c0_55 = arith.constant 0 : index
    %75 = vector.load %arg3[%c0_53, %c24_54, %c0_55] : memref<1x32x8xf32, #tpu.memory_space<vmem>>, vector<1x8x8xf32>
    %76 = vector.shape_cast %75 : vector<1x8x8xf32> to vector<8x8xf32>
    %cst_56 = arith.constant dense<0.000000e+00> : vector<8x8xf32>
    %77 = tpu.matmul %74, %72, %cst_56 {dimension_numbers = #tpu.dot_dimension_numbers<[0], [0], [1], [1], [0, 1, 1, 1], [], []>} : vector<8x8xf32>, vector<8x8xf32>, vector<8x8xf32> -> vector<8x8xf32>
    %cst_57 = arith.constant dense<0xFF800000> : vector<8xf32>
    %78 = vector.multi_reduction <maximumf>, %77, %cst_57 [0] : vector<8x8xf32> to vector<8xf32>
    %79 = vector.shape_cast %78 : vector<8xf32> to vector<1x8xf32>
    %80 = vector.broadcast %79 : vector<1x8xf32> to vector<8x8xf32>
    %81 = arith.subf %77, %80 : vector<8x8xf32>
    %82 = math.exp %81 : vector<8x8xf32>
    %cst_58 = arith.constant dense<0.000000e+00> : vector<8xf32>
    %83 = vector.multi_reduction <add>, %82, %cst_58 [0] : vector<8x8xf32> to vector<8xf32>
    %84 = vector.shape_cast %83 : vector<8xf32> to vector<1x8xf32>
    %cst_59 = arith.constant dense<0.000000e+00> : vector<8x8xf32>
    %85 = tpu.matmul %76, %82, %cst_59 {dimension_numbers = #tpu.dot_dimension_numbers<[1], [0], [0], [1], [0, 0, 1, 1], [], []>} : vector<8x8xf32>, vector<8x8xf32>, vector<8x8xf32> -> vector<8x8xf32>
    %86 = tpu.reciprocal %84 : vector<1x8xf32> -> vector<1x8xf32>
    %87 = vector.broadcast %86 : vector<1x8xf32> to vector<8x8xf32>
    %88 = arith.mulf %85, %87 : vector<8x8xf32>
    %c0_60 = arith.constant 0 : index
    %c24_61 = arith.constant 24 : index
    %c0_62 = arith.constant 0 : index
    %89 = vector.load %arg4[%c0_60, %c24_61, %c0_62] : memref<1x32x8xf32, #tpu.memory_space<vmem>>, vector<1x8x8xf32>
    %90 = vector.shape_cast %89 : vector<1x8x8xf32> to vector<8x8xf32>
    %91 = vector.shape_cast %88 : vector<8x8xf32> to vector<1x8x8xf32>
    tpu.vector_store %arg4[%c0_60, %c24_61, %c0_62], %91 {strides = array<i32>} : memref<1x32x8xf32, #tpu.memory_space<vmem>>, vector<1x8x8xf32>,
    return
  }
  func.func @transform_0(%arg0: i32) -> (i32, i32, i32) {
    %c0_i32 = arith.constant 0 : i32
    %c0_i32_0 = arith.constant 0 : i32
    %c0_i32_1 = arith.constant 0 : i32
    return %arg0, %c0_i32, %c0_i32_0 : i32, i32, i32
  }
  func.func @transform_1(%arg0: i32) -> (i32, i32, i32) {
    %c0_i32 = arith.constant 0 : i32
    %c0_i32_0 = arith.constant 0 : i32
    %c0_i32_1 = arith.constant 0 : i32
    return %arg0, %c0_i32, %c0_i32_0 : i32, i32, i32
  }
  func.func @transform_2(%arg0: i32) -> (i32, i32, i32) {
    %c0_i32 = arith.constant 0 : i32
    %c0_i32_0 = arith.constant 0 : i32
    %c0_i32_1 = arith.constant 0 : i32
    return %arg0, %c0_i32, %c0_i32_0 : i32, i32, i32
  }
  func.func @transform_3(%arg0: i32) -> (i32, i32, i32) {
    %c0_i32 = arith.constant 0 : i32
    %c0_i32_0 = arith.constant 0 : i32
    %c0_i32_1 = arith.constant 0 : i32
    return %arg0, %c0_i32, %c0_i32_0 : i32, i32, i32
  }
}

</mosaic_0001>

<llo_original>
// kernel: tpu_custom_call.1
$region0: #{tpu_custom_call.1}
  #allocation0 [shape = 'u32[]', space=smem, size = 0x4, offset = 0x4, fixed_abs, tag = 'smem constant byte address 0x4 - core index']
  #allocation1 [shape = 'u32[72,128]{1,0:T(1,128)}', space=vmem, size = 0x9000, scoped, tag = 'internal scratch']
  %s0 = inlined_call_operand.vmem [shape: f32[2,32,8], index: 0, kind: input, shape index: {}]
  %s1 = inlined_call_operand.vmem [shape: f32[2,32,8], index: 1, kind: input, shape index: {}]
  %s2 = inlined_call_operand.vmem [shape: f32[2,32,8], index: 2, kind: input, shape index: {}]
  %s3 = inlined_call_operand.vmem [shape: f32[2,32,8], index: 3, kind: output, shape index: {}]
  %s4 = sld [smem:[#allocation0]]
  $region45: #{tpu_custom_call.1} parent=0
    _
  %s6 = ssub.s32 1, %s4
  %s7 = scalar_select 0, %s6, %s4
  loop: start=0, step=1, limit=4
  $region2: #{tpu_custom_call.1} parent=0 // loop_pre_header
    _
  $region3: #{tpu_custom_call.1} parent=0 // loop_header
    %s9 = sphi 0, %s13
    %p10 = scmp.ge.s32.totalorder %s9, 4
    %s19 = sphi 0, %s21
    %s22 = sphi 0, %s19
    %s23 = sphi 0, %s22
    %s39 = sphi 0, %s23
    %s45 = sphi 0, %s47
    %s48 = sphi 0, %s45
    %s49 = sphi 0, %s48
    %s65 = sphi 0, %s49
    %s71 = sphi 0, %s73
    %s74 = sphi 0, %s71
    %s75 = sphi 0, %s74
    %s91 = sphi 0, %s75
    %s97 = sphi 0, %s99
    %s100 = sphi 0, %s97
    %s101 = sphi 0, %s100
    %s117 = sphi 0, %s101
  $region4: #{tpu_custom_call.1} parent=0 // loop_header_branch
    %12 = sbr.rel (%p10) target = $region8
  $region5: #{tpu_custom_call.1} parent=0 // loop_body
    %s14 = ssub.s32 %s9, 1
    %s15 = ssub.s32 %s9, 2
    %s16 = sadd.s32 %s9, 1
    %s17 = ssub.s32 %s9, %s16
    %p18 = scmp.eq.s32.totalorder %s17, 0
    %s20 = sadd.s32 %s19, 1
    %s21 = scalar_select %p18, %s19, %s20
    %p24 = pneg %p18
    %p25 = scmp.eq.s32.totalorder %s9, 1
    %p26 = por %p24, %p25
    %p27 = scmp.ne.s32.totalorder %s19, %s22
    %p28 = scmp.eq.s32.totalorder %s9, 0
    %p29 = por %p27, %p28
    %p30 = scmp.ne.s32.totalorder %s19, %s22
    %p31 = scmp.eq.s32.totalorder %s14, 1
    %p32 = por %p30, %p31
    %p33 = scmp.ne.s32.totalorder %s22, %s23
    %p34 = scmp.eq.s32.totalorder %s14, 0
    %p35 = por %p33, %p34
    %p36 = scmp.ne.s32.totalorder %s22, %s23
    %p37 = scmp.eq.s32.totalorder %s15, 1
    %p38 = por %p36, %p37
    %p40 = scmp.ne.s32.totalorder %s23, %s39
    %p41 = scmp.eq.s32.totalorder %s15, 0
    %p42 = por %p40, %p41
    %s43 = ssub.s32 %s9, %s16
    %p44 = scmp.eq.s32.totalorder %s43, 0
    %s46 = sadd.s32 %s45, 1
    %s47 = scalar_select %p44, %s45, %s46
    %p50 = pneg %p44
    %p51 = scmp.eq.s32.totalorder %s9, 1
    %p52 = por %p50, %p51
    %p53 = scmp.ne.s32.totalorder %s45, %s48
    %p54 = scmp.eq.s32.totalorder %s9, 0
    %p55 = por %p53, %p54
    %p56 = scmp.ne.s32.totalorder %s45, %s48
    %p57 = scmp.eq.s32.totalorder %s14, 1
    %p58 = por %p56, %p57
    %p59 = scmp.ne.s32.totalorder %s48, %s49
    %p60 = scmp.eq.s32.totalorder %s14, 0
    %p61 = por %p59, %p60
    %p62 = scmp.ne.s32.totalorder %s48, %s49
    %p63 = scmp.eq.s32.totalorder %s15, 1
    %p64 = por %p62, %p63
    %p66 = scmp.ne.s32.totalorder %s49, %s65
    %p67 = scmp.eq.s32.totalorder %s15, 0
    %p68 = por %p66, %p67
    %s69 = ssub.s32 %s9, %s16
    %p70 = scmp.eq.s32.totalorder %s69, 0
    %s72 = sadd.s32 %s71, 1
    %s73 = scalar_select %p70, %s71, %s72
    %p76 = pneg %p70
    %p77 = scmp.eq.s32.totalorder %s9, 1
    %p78 = por %p76, %p77
    %p79 = scmp.ne.s32.totalorder %s71, %s74
    %p80 = scmp.eq.s32.totalorder %s9, 0
    %p81 = por %p79, %p80
    %p82 = scmp.ne.s32.totalorder %s71, %s74
    %p83 = scmp.eq.s32.totalorder %s14, 1
    %p84 = por %p82, %p83
    %p85 = scmp.ne.s32.totalorder %s74, %s75
    %p86 = scmp.eq.s32.totalorder %s14, 0
    %p87 = por %p85, %p86
    %p88 = scmp.ne.s32.totalorder %s74, %s75
    %p89 = scmp.eq.s32.totalorder %s15, 1
    %p90 = por %p88, %p89
    %p92 = scmp.ne.s32.totalorder %s75, %s91
    %p93 = scmp.eq.s32.totalorder %s15, 0
    %p94 = por %p92, %p93
    %s95 = ssub.s32 %s9, %s16
    %p96 = scmp.eq.s32.totalorder %s95, 0
    %s98 = sadd.s32 %s97, 1
    %s99 = scalar_select %p96, %s97, %s98
    %p102 = pneg %p96
    %p103 = scmp.eq.s32.totalorder %s9, 1
    %p104 = por %p102, %p103
    %p105 = scmp.ne.s32.totalorder %s97, %s100
    %p106 = scmp.eq.s32.totalorder %s9, 0
    %p107 = por %p105, %p106
    %p108 = scmp.ne.s32.totalorder %s97, %s100
    %p109 = scmp.eq.s32.totalorder %s14, 1
    %p110 = por %p108, %p109
    %p111 = scmp.ne.s32.totalorder %s100, %s101
    %p112 = scmp.eq.s32.totalorder %s14, 0
    %p113 = por %p111, %p112
    %p114 = scmp.ne.s32.totalorder %s100, %s101
    %p115 = scmp.eq.s32.totalorder %s15, 1
    %p116 = por %p114, %p115
    %p118 = scmp.ne.s32.totalorder %s101, %s117
    %p119 = scmp.eq.s32.totalorder %s15, 0
    %p120 = por %p118, %p119
    %p121 = scmp.le.s32.totalorder 1, %s9
    %p122 = scmp.lt.s32.totalorder %s9, 3
    %p123 = pnand %p121, %p122
    %p124 = pneg %p123
    // Predicated region
    $region9: #{tpu_custom_call.1} parent=5 // pred_check
      _
    $region10: #{tpu_custom_call.1} parent=5 // pred_check_branch
      %126 = sbr.rel (%p123) target = $region12
    $region11: #{tpu_custom_call.1} parent=5 // pred_region
      %s127 = ssub.s32 %s9, 1
    $region12: #{tpu_custom_call.1} parent=5 // pred_fallthru
      _
    %p128 = scmp.lt.s32.totalorder %s9, 2
    // Predicated region
    $region13: #{tpu_custom_call.1} parent=5 // pred_check
      %p129 = pneg %p128
    $region14: #{tpu_custom_call.1} parent=5 // pred_check_branch
      %131 = sbr.rel (%p129) target = $region16
    $region15: #{tpu_custom_call.1} parent=5 // pred_region
      // Predicated region
      $region17: #{tpu_custom_call.1} parent=15 // pred_check
        %p132 = pneg %p29
      $region18: #{tpu_custom_call.1} parent=15 // pred_check_branch
        %134 = sbr.rel (%p132) target = $region20
      $region19: #{tpu_custom_call.1} parent=15 // pred_region
        %p135 = scmp.lt.s32.totalorder %s9, 1
        %s136 = scalar_select %p135, %s9, 1
        %s137 = smul.addr %s136, 4
        %s138 = smul.addr %s137, 8
        %s139 = scalar_lea.vmem %s0, %s138
      $region20: #{tpu_custom_call.1} parent=15 // pred_fallthru
        _
      // Predicated region
      $region21: #{tpu_custom_call.1} parent=15 // pred_check
        %p140 = pneg %p55
      $region22: #{tpu_custom_call.1} parent=15 // pred_check_branch
        %142 = sbr.rel (%p140) target = $region24
      $region23: #{tpu_custom_call.1} parent=15 // pred_region
        %p143 = scmp.lt.s32.totalorder %s9, 1
        %s144 = scalar_select %p143, %s9, 1
        %s145 = smul.addr %s144, 4
        %s146 = smul.addr %s145, 8
        %s147 = scalar_lea.vmem %s1, %s146
      $region24: #{tpu_custom_call.1} parent=15 // pred_fallthru
        _
      // Predicated region
      $region25: #{tpu_custom_call.1} parent=15 // pred_check
        %p148 = pneg %p81
      $region26: #{tpu_custom_call.1} parent=15 // pred_check_branch
        %150 = sbr.rel (%p148) target = $region28
      $region27: #{tpu_custom_call.1} parent=15 // pred_region
        %p151 = scmp.lt.s32.totalorder %s9, 1
        %s152 = scalar_select %p151, %s9, 1
        %s153 = smul.addr %s152, 4
        %s154 = smul.addr %s153, 8
        %s155 = scalar_lea.vmem %s2, %s154
      $region28: #{tpu_custom_call.1} parent=15 // pred_fallthru
        _
    $region16: #{tpu_custom_call.1} parent=5 // pred_fallthru
      _
    %p156 = scmp.le.s32.totalorder 1, %s9
    %p157 = scmp.lt.s32.totalorder %s9, 3
    %p158 = pnand %p156, %p157
    %p159 = pneg %p158
    // Predicated region
    $region29: #{tpu_custom_call.1} parent=5 // pred_check
      _
    $region30: #{tpu_custom_call.1} parent=5 // pred_check_branch
      %161 = sbr.rel (%p158) target = $region32
    $region31: #{tpu_custom_call.1} parent=5 // pred_region
      %s162 = ssub.s32 %s9, 1
      %p163 = scmp.lt.s32.totalorder %s14, 1
      %s164 = scalar_select %p163, %s14, 1
      %s165 = smul.addr %s164, 4
      %s166 = smul.addr %s165, 8
      %s167 = scalar_lea.vmem %s0, %s166
      %p168 = pneg %p35
      %p169 = pneg %p32
      %p170 = scmp.lt.s32.totalorder %s14, 1
      %s171 = scalar_select %p170, %s14, 1
      %s172 = smul.addr %s171, 4
      %s173 = smul.addr %s172, 8
      %s174 = scalar_lea.vmem %s1, %s173
      %p175 = pneg %p61
      %p176 = pneg %p58
      %p177 = scmp.lt.s32.totalorder %s14, 1
      %s178 = scalar_select %p177, %s14, 1
      %s179 = smul.addr %s178, 4
      %s180 = smul.addr %s179, 8
      %s181 = scalar_lea.vmem %s2, %s180
      %p182 = pneg %p87
      %p183 = pneg %p84
      %p184 = pneg %p113
      %p185 = pneg %p110
      %p186 = scmp.lt.s32.totalorder %s14, 1
      %s187 = scalar_select %p186, %s14, 1
      %s188 = smul.addr %s187, 4
      %s189 = smul.addr %s188, 8
      %s190 = scalar_lea.vmem %s3, %s189
      %p191 = scmp.lt.s32.totalorder %s14, 1
      %s192 = scalar_select %p191, %s14, 1
      %s193 = smul.addr %s192, 4
      %s194 = smul.addr %s193, 8
      %s195 = scalar_lea.vmem %s0, %s194
      %p196 = scmp.lt.s32.totalorder %s14, 1
      %s197 = scalar_select %p196, %s14, 1
      %s198 = smul.addr %s197, 4
      %s199 = smul.addr %s198, 8
      %s200 = scalar_lea.vmem %s1, %s199
      %p201 = scmp.lt.s32.totalorder %s14, 1
      %s202 = scalar_select %p201, %s14, 1
      %s203 = smul.addr %s202, 4
      %s204 = smul.addr %s203, 8
      %s205 = scalar_lea.vmem %s2, %s204
      %p206 = scmp.lt.s32.totalorder %s14, 1
      %s207 = scalar_select %p206, %s14, 1
      %s208 = smul.addr %s207, 4
      %s209 = smul.addr %s208, 8
      %s210 = scalar_lea.vmem %s3, %s209
      %v211 = vld [vmem:[%s195] sm:$0xff]
      %v212 = vmul.f32 %v211, 0.35355338
      %v213 = vld [vmem:[%s200] sm:$0xff]
      %v214 = vld [vmem:[%s205] sm:$0xff]
      %215 = vxpose.xlu0.b32.start [1/16] %v213, 128
      %216 = vxpose.xlu0.b32.cont [2/16] 0.0, 128
      %217 = vxpose.xlu0.b32.cont [3/16] 0.0, 128
      %218 = vxpose.xlu0.b32.cont [4/16] 0.0, 128
      %219 = vxpose.xlu0.b32.cont [5/16] 0.0, 128
      %220 = vxpose.xlu0.b32.cont [6/16] 0.0, 128
      %221 = vxpose.xlu0.b32.cont [7/16] 0.0, 128
      %222 = vxpose.xlu0.b32.cont [8/16] 0.0, 128
      %223 = vxpose.xlu0.b32.cont [9/16] 0.0, 128
      %224 = vxpose.xlu0.b32.cont [10/16] 0.0, 128
      %225 = vxpose.xlu0.b32.cont [11/16] 0.0, 128
      %226 = vxpose.xlu0.b32.cont [12/16] 0.0, 128
      %227 = vxpose.xlu0.b32.cont [13/16] 0.0, 128
      %228 = vxpose.xlu0.b32.cont [14/16] 0.0, 128
      %229 = vxpose.xlu0.b32.cont [15/16] 0.0, 128
      %230 = vxpose.xlu0.b32.end [16/16] 0.0, 128
      %v231 = vpop.trf.xlu0
      %v232 = vpop.trf.xlu0
      %v233 = vpop.trf.xlu0
      %v234 = vpop.trf.xlu0
      %v235 = vpop.trf.xlu0
      %v236 = vpop.trf.xlu0
      %v237 = vpop.trf.xlu0
      %v238 = vpop.trf.xlu0
      %v239 = vpop.trf.xlu0
      %v240 = vpop.trf.xlu0
      %v241 = vpop.trf.xlu0
      %v242 = vpop.trf.xlu0
      %v243 = vpop.trf.xlu0
      %v244 = vpop.trf.xlu0
      %v245 = vpop.trf.xlu0
      %v246 = vpop.trf.xlu0
      %vm247 = vcmask 64512
      %v249 = vsel %vm247, %v231, 0
      %251 = vmatpush.msra.mxu0 0.0
      %252 = vmatpush.msra.mxu0 0.0
      %253 = vmatpush.msra.mxu0 0.0
      %254 = vmatpush.msra.mxu0 0.0
      %255 = vmatpush.msra.mxu0 0.0
      %256 = vmatpush.msra.mxu0 0.0
      %257 = vmatpush.msra.mxu0 0.0
      %258 = vmatpush.msra.mxu0 0.0
      %259 = vmatpush.msra.mxu0 0.0
      %260 = vmatpush.msra.mxu0 0.0
      %261 = vmatpush.msra.mxu0 0.0
      %262 = vmatpush.msra.mxu0 0.0
      %263 = vmatpush.msra.mxu0 0.0
      %264 = vmatpush.msra.mxu0 0.0
      %265 = vmatpush.msra.mxu0 0.0
      %266 = vmatpush.msra.mxu0 %v212
      %267 = vmatmul.f32.gmra.mxu0 %v249
      %v268 = vpop.f32.mrf.mxu0
      %v269 = vadd.f32 0.0, %v268
      %270 = vdwg.mxu0
      %v271 = vsel %vm247, %v269, -inf
      %v272 = vrot.slane %v271, 4
      %v273 = vmax.f32 %v271, %v272
      %v274 = vrot.slane %v273, 2
      %v275 = vmax.f32 %v273, %v274
      %v276 = vrot.slane %v275, 1
      %v277 = vmax.f32 %v275, %v276
      %v278 = vsub.f32 %v269, %v277
      %v279 = vmul.f32 %v278, 1.442695
      %v280 = vpow.pop %v279
      %v281 = vsel %vm247, %v280, 0.0
      %v282 = vrot.slane %v281, 4
      %v283 = vadd.f32 %v281, %v282
      %v284 = vrot.slane %v283, 2
      %v285 = vadd.f32 %v283, %v284
      %v286 = vrot.slane %v285, 1
      %v287 = vadd.f32 %v285, %v286
      %v289 = vsel %vm247, %v214, 0
      %291 = vmatpush.msra.mxu0 0.0
      %292 = vmatpush.msra.mxu0 0.0
      %293 = vmatpush.msra.mxu0 0.0
      %294 = vmatpush.msra.mxu0 0.0
      %295 = vmatpush.msra.mxu0 0.0
      %296 = vmatpush.msra.mxu0 0.0
      %297 = vmatpush.msra.mxu0 0.0
      %298 = vmatpush.msra.mxu0 0.0
      %299 = vmatpush.msra.mxu0 0.0
      %300 = vmatpush.msra.mxu0 0.0
      %301 = vmatpush.msra.mxu0 0.0
      %302 = vmatpush.msra.mxu0 0.0
      %303 = vmatpush.msra.mxu0 0.0
      %304 = vmatpush.msra.mxu0 0.0
      %305 = vmatpush.msra.mxu0 0.0
      %306 = vmatpush.msra.mxu0 %v280
      %307 = vmatmul.f32.gmra.mxu0 %v289
      %v308 = vpop.f32.mrf.mxu0
      %v309 = vadd.f32 0.0, %v308
      %310 = vdwg.mxu0
      %v311 = vrcp.pop %v287
      %v312 = vmul.f32 %v287, %v311
      %v313 = vsub.f32 1.0, %v312
      %v314 = vmul.f32 %v311, %v313
      %v315 = vadd.f32 %v311, %v314
      %vm316 = vweird.f32 %v287
      %vm317 = vweird.f32 %v311
      %vm318 = vmor %vm316, %vm317
      %v319 = vsel %vm318, %v311, %v315
      %v320 = vand.u32 2147483647, %v287
      %vm321 = vcmp.eq.f32.partialorder %v320, 8.507059e+37
      %v322 = vand.u32 %v287, 2147483648
      %v323 = vor.u32 1.1754944e-38, %v322
      %v324 = vsel %vm321, %v323, %v319
      %v325 = vmul.f32 %v309, %v324
      %326 = vst.msk [vmem:[%s210] sm:$0xff] %vm247, %v325
      %v327 = vld [vmem:[%s195 + $0x8] sm:$0xff]
      %v328 = vmul.f32 %v327, 0.35355338
      %v329 = vld [vmem:[%s200 + $0x8] sm:$0xff]
      %v330 = vld [vmem:[%s205 + $0x8] sm:$0xff]
      %331 = vxpose.xlu0.b32.start [1/16] %v329, 128
      %332 = vxpose.xlu0.b32.cont [2/16] 0.0, 128
      %333 = vxpose.xlu0.b32.cont [3/16] 0.0, 128
      %334 = vxpose.xlu0.b32.cont [4/16] 0.0, 128
      %335 = vxpose.xlu0.b32.cont [5/16] 0.0, 128
      %336 = vxpose.xlu0.b32.cont [6/16] 0.0, 128
      %337 = vxpose.xlu0.b32.cont [7/16] 0.0, 128
      %338 = vxpose.xlu0.b32.cont [8/16] 0.0, 128
      %339 = vxpose.xlu0.b32.cont [9/16] 0.0, 128
      %340 = vxpose.xlu0.b32.cont [10/16] 0.0, 128
      %341 = vxpose.xlu0.b32.cont [11/16] 0.0, 128
      %342 = vxpose.xlu0.b32.cont [12/16] 0.0, 128
      %343 = vxpose.xlu0.b32.cont [13/16] 0.0, 128
      %344 = vxpose.xlu0.b32.cont [14/16] 0.0, 128
      %345 = vxpose.xlu0.b32.cont [15/16] 0.0, 128
      %346 = vxpose.xlu0.b32.end [16/16] 0.0, 128
      %v347 = vpop.trf.xlu0
      %v348 = vpop.trf.xlu0
      %v349 = vpop.trf.xlu0
      %v350 = vpop.trf.xlu0
      %v351 = vpop.trf.xlu0
      %v352 = vpop.trf.xlu0
      %v353 = vpop.trf.xlu0
      %v354 = vpop.trf.xlu0
      %v355 = vpop.trf.xlu0
      %v356 = vpop.trf.xlu0
      %v357 = vpop.trf.xlu0
      %v358 = vpop.trf.xlu0
      %v359 = vpop.trf.xlu0
      %v360 = vpop.trf.xlu0
      %v361 = vpop.trf.xlu0
      %v362 = vpop.trf.xlu0
      %v364 = vsel %vm247, %v347, 0
      %366 = vmatpush.msra.mxu0 0.0
      %367 = vmatpush.msra.mxu0 0.0
      %368 = vmatpush.msra.mxu0 0.0
      %369 = vmatpush.msra.mxu0 0.0
      %370 = vmatpush.msra.mxu0 0.0
      %371 = vmatpush.msra.mxu0 0.0
      %372 = vmatpush.msra.mxu0 0.0
      %373 = vmatpush.msra.mxu0 0.0
      %374 = vmatpush.msra.mxu0 0.0
      %375 = vmatpush.msra.mxu0 0.0
      %376 = vmatpush.msra.mxu0 0.0
      %377 = vmatpush.msra.mxu0 0.0
      %378 = vmatpush.msra.mxu0 0.0
      %379 = vmatpush.msra.mxu0 0.0
      %380 = vmatpush.msra.mxu0 0.0
      %381 = vmatpush.msra.mxu0 %v328
      %382 = vmatmul.f32.gmra.mxu0 %v364
      %v383 = vpop.f32.mrf.mxu0
      %v384 = vadd.f32 0.0, %v383
      %385 = vdwg.mxu0
      %v386 = vsel %vm247, %v384, -inf
      %v387 = vrot.slane %v386, 4
      %v388 = vmax.f32 %v386, %v387
      %v389 = vrot.slane %v388, 2
      %v390 = vmax.f32 %v388, %v389
      %v391 = vrot.slane %v390, 1
      %v392 = vmax.f32 %v390, %v391
      %v393 = vsub.f32 %v384, %v392
      %v394 = vmul.f32 %v393, 1.442695
      %v395 = vpow.pop %v394
      %v396 = vsel %vm247, %v395, 0.0
      %v397 = vrot.slane %v396, 4
      %v398 = vadd.f32 %v396, %v397
      %v399 = vrot.slane %v398, 2
      %v400 = vadd.f32 %v398, %v399
      %v401 = vrot.slane %v400, 1
      %v402 = vadd.f32 %v400, %v401
      %v404 = vsel %vm247, %v330, 0
      %406 = vmatpush.msra.mxu0 0.0
      %407 = vmatpush.msra.mxu0 0.0
      %408 = vmatpush.msra.mxu0 0.0
      %409 = vmatpush.msra.mxu0 0.0
      %410 = vmatpush.msra.mxu0 0.0
      %411 = vmatpush.msra.mxu0 0.0
      %412 = vmatpush.msra.mxu0 0.0
      %413 = vmatpush.msra.mxu0 0.0
      %414 = vmatpush.msra.mxu0 0.0
      %415 = vmatpush.msra.mxu0 0.0
      %416 = vmatpush.msra.mxu0 0.0
      %417 = vmatpush.msra.mxu0 0.0
      %418 = vmatpush.msra.mxu0 0.0
      %419 = vmatpush.msra.mxu0 0.0
      %420 = vmatpush.msra.mxu0 0.0
      %421 = vmatpush.msra.mxu0 %v395
      %422 = vmatmul.f32.gmra.mxu0 %v404
      %v423 = vpop.f32.mrf.mxu0
      %v424 = vadd.f32 0.0, %v423
      %425 = vdwg.mxu0
      %v426 = vrcp.pop %v402
      %v427 = vmul.f32 %v402, %v426
      %v428 = vsub.f32 1.0, %v427
      %v429 = vmul.f32 %v426, %v428
      %v430 = vadd.f32 %v426, %v429
      %vm431 = vweird.f32 %v402
      %vm432 = vweird.f32 %v426
      %vm433 = vmor %vm431, %vm432
      %v434 = vsel %vm433, %v426, %v430
      %v435 = vand.u32 2147483647, %v402
      %vm436 = vcmp.eq.f32.partialorder %v435, 8.507059e+37
      %v437 = vand.u32 %v402, 2147483648
      %v438 = vor.u32 1.1754944e-38, %v437
      %v439 = vsel %vm436, %v438, %v434
      %v440 = vmul.f32 %v424, %v439
      %441 = vst.msk [vmem:[%s210 + $0x8] sm:$0xff] %vm247, %v440
      %v442 = vld [vmem:[%s195 + $0x10] sm:$0xff]
      %v443 = vmul.f32 %v442, 0.35355338
      %v444 = vld [vmem:[%s200 + $0x10] sm:$0xff]
      %v445 = vld [vmem:[%s205 + $0x10] sm:$0xff]
      %446 = vxpose.xlu0.b32.start [1/16] %v444, 128
      %447 = vxpose.xlu0.b32.cont [2/16] 0.0, 128
      %448 = vxpose.xlu0.b32.cont [3/16] 0.0, 128
      %449 = vxpose.xlu0.b32.cont [4/16] 0.0, 128
      %450 = vxpose.xlu0.b32.cont [5/16] 0.0, 128
      %451 = vxpose.xlu0.b32.cont [6/16] 0.0, 128
      %452 = vxpose.xlu0.b32.cont [7/16] 0.0, 128
      %453 = vxpose.xlu0.b32.cont [8/16] 0.0, 128
      %454 = vxpose.xlu0.b32.cont [9/16] 0.0, 128
      %455 = vxpose.xlu0.b32.cont [10/16] 0.0, 128
      %456 = vxpose.xlu0.b32.cont [11/16] 0.0, 128
      %457 = vxpose.xlu0.b32.cont [12/16] 0.0, 128
      %458 = vxpose.xlu0.b32.cont [13/16] 0.0, 128
      %459 = vxpose.xlu0.b32.cont [14/16] 0.0, 128
      %460 = vxpose.xlu0.b32.cont [15/16] 0.0, 128
      %461 = vxpose.xlu0.b32.end [16/16] 0.0, 128
      %v462 = vpop.trf.xlu0
      %v463 = vpop.trf.xlu0
      %v464 = vpop.trf.xlu0
      %v465 = vpop.trf.xlu0
      %v466 = vpop.trf.xlu0
      %v467 = vpop.trf.xlu0
      %v468 = vpop.trf.xlu0
      %v469 = vpop.trf.xlu0
      %v470 = vpop.trf.xlu0
      %v471 = vpop.trf.xlu0
      %v472 = vpop.trf.xlu0
      %v473 = vpop.trf.xlu0
      %v474 = vpop.trf.xlu0
      %v475 = vpop.trf.xlu0
      %v476 = vpop.trf.xlu0
      %v477 = vpop.trf.xlu0
      %v479 = vsel %vm247, %v462, 0
      %481 = vmatpush.msra.mxu0 0.0
      %482 = vmatpush.msra.mxu0 0.0
      %483 = vmatpush.msra.mxu0 0.0
      %484 = vmatpush.msra.mxu0 0.0
      %485 = vmatpush.msra.mxu0 0.0
      %486 = vmatpush.msra.mxu0 0.0
      %487 = vmatpush.msra.mxu0 0.0
      %488 = vmatpush.msra.mxu0 0.0
      %489 = vmatpush.msra.mxu0 0.0
      %490 = vmatpush.msra.mxu0 0.0
      %491 = vmatpush.msra.mxu0 0.0
      %492 = vmatpush.msra.mxu0 0.0
      %493 = vmatpush.msra.mxu0 0.0
      %494 = vmatpush.msra.mxu0 0.0
      %495 = vmatpush.msra.mxu0 0.0
      %496 = vmatpush.msra.mxu0 %v443
      %497 = vmatmul.f32.gmra.mxu0 %v479
      %v498 = vpop.f32.mrf.mxu0
      %v499 = vadd.f32 0.0, %v498
      %500 = vdwg.mxu0
      %v501 = vsel %vm247, %v499, -inf
      %v502 = vrot.slane %v501, 4
      %v503 = vmax.f32 %v501, %v502
      %v504 = vrot.slane %v503, 2
      %v505 = vmax.f32 %v503, %v504
      %v506 = vrot.slane %v505, 1
      %v507 = vmax.f32 %v505, %v506
      %v508 = vsub.f32 %v499, %v507
      %v509 = vmul.f32 %v508, 1.442695
      %v510 = vpow.pop %v509
      %v511 = vsel %vm247, %v510, 0.0
      %v512 = vrot.slane %v511, 4
      %v513 = vadd.f32 %v511, %v512
      %v514 = vrot.slane %v513, 2
      %v515 = vadd.f32 %v513, %v514
      %v516 = vrot.slane %v515, 1
      %v517 = vadd.f32 %v515, %v516
      %v519 = vsel %vm247, %v445, 0
      %521 = vmatpush.msra.mxu0 0.0
      %522 = vmatpush.msra.mxu0 0.0
      %523 = vmatpush.msra.mxu0 0.0
      %524 = vmatpush.msra.mxu0 0.0
      %525 = vmatpush.msra.mxu0 0.0
      %526 = vmatpush.msra.mxu0 0.0
      %527 = vmatpush.msra.mxu0 0.0
      %528 = vmatpush.msra.mxu0 0.0
      %529 = vmatpush.msra.mxu0 0.0
      %530 = vmatpush.msra.mxu0 0.0
      %531 = vmatpush.msra.mxu0 0.0
      %532 = vmatpush.msra.mxu0 0.0
      %533 = vmatpush.msra.mxu0 0.0
      %534 = vmatpush.msra.mxu0 0.0
      %535 = vmatpush.msra.mxu0 0.0
      %536 = vmatpush.msra.mxu0 %v510
      %537 = vmatmul.f32.gmra.mxu0 %v519
      %v538 = vpop.f32.mrf.mxu0
      %v539 = vadd.f32 0.0, %v538
      %540 = vdwg.mxu0
      %v541 = vrcp.pop %v517
      %v542 = vmul.f32 %v517, %v541
      %v543 = vsub.f32 1.0, %v542
      %v544 = vmul.f32 %v541, %v543
      %v545 = vadd.f32 %v541, %v544
      %vm546 = vweird.f32 %v517
      %vm547 = vweird.f32 %v541
      %vm548 = vmor %vm546, %vm547
      %v549 = vsel %vm548, %v541, %v545
      %v550 = vand.u32 2147483647, %v517
      %vm551 = vcmp.eq.f32.partialorder %v550, 8.507059e+37
      %v552 = vand.u32 %v517, 2147483648
      %v553 = vor.u32 1.1754944e-38, %v552
      %v554 = vsel %vm551, %v553, %v549
      %v555 = vmul.f32 %v539, %v554
      %556 = vst.msk [vmem:[%s210 + $0x10] sm:$0xff] %vm247, %v555
      %v557 = vld [vmem:[%s195 + $0x18] sm:$0xff]
      %v558 = vmul.f32 %v557, 0.35355338
      %v559 = vld [vmem:[%s200 + $0x18] sm:$0xff]
      %v560 = vld [vmem:[%s205 + $0x18] sm:$0xff]
      %561 = vxpose.xlu0.b32.start [1/16] %v559, 128
      %562 = vxpose.xlu0.b32.cont [2/16] 0.0, 128
      %563 = vxpose.xlu0.b32.cont [3/16] 0.0, 128
      %564 = vxpose.xlu0.b32.cont [4/16] 0.0, 128
      %565 = vxpose.xlu0.b32.cont [5/16] 0.0, 128
      %566 = vxpose.xlu0.b32.cont [6/16] 0.0, 128
      %567 = vxpose.xlu0.b32.cont [7/16] 0.0, 128
      %568 = vxpose.xlu0.b32.cont [8/16] 0.0, 128
      %569 = vxpose.xlu0.b32.cont [9/16] 0.0, 128
      %570 = vxpose.xlu0.b32.cont [10/16] 0.0, 128
      %571 = vxpose.xlu0.b32.cont [11/16] 0.0, 128
      %572 = vxpose.xlu0.b32.cont [12/16] 0.0, 128
      %573 = vxpose.xlu0.b32.cont [13/16] 0.0, 128
      %574 = vxpose.xlu0.b32.cont [14/16] 0.0, 128
      %575 = vxpose.xlu0.b32.cont [15/16] 0.0, 128
      %576 = vxpose.xlu0.b32.end [16/16] 0.0, 128
      %v577 = vpop.trf.xlu0
      %v578 = vpop.trf.xlu0
      %v579 = vpop.trf.xlu0
      %v580 = vpop.trf.xlu0
      %v581 = vpop.trf.xlu0
      %v582 = vpop.trf.xlu0
      %v583 = vpop.trf.xlu0
      %v584 = vpop.trf.xlu0
      %v585 = vpop.trf.xlu0
      %v586 = vpop.trf.xlu0
      %v587 = vpop.trf.xlu0
      %v588 = vpop.trf.xlu0
      %v589 = vpop.trf.xlu0
      %v590 = vpop.trf.xlu0
      %v591 = vpop.trf.xlu0
      %v592 = vpop.trf.xlu0
      %v594 = vsel %vm247, %v577, 0
      %596 = vmatpush.msra.mxu0 0.0
      %597 = vmatpush.msra.mxu0 0.0
      %598 = vmatpush.msra.mxu0 0.0
      %599 = vmatpush.msra.mxu0 0.0
      %600 = vmatpush.msra.mxu0 0.0
      %601 = vmatpush.msra.mxu0 0.0
      %602 = vmatpush.msra.mxu0 0.0
      %603 = vmatpush.msra.mxu0 0.0
      %604 = vmatpush.msra.mxu0 0.0
      %605 = vmatpush.msra.mxu0 0.0
      %606 = vmatpush.msra.mxu0 0.0
      %607 = vmatpush.msra.mxu0 0.0
      %608 = vmatpush.msra.mxu0 0.0
      %609 = vmatpush.msra.mxu0 0.0
      %610 = vmatpush.msra.mxu0 0.0
      %611 = vmatpush.msra.mxu0 %v558
      %612 = vmatmul.f32.gmra.mxu0 %v594
      %v613 = vpop.f32.mrf.mxu0
      %v614 = vadd.f32 0.0, %v613
      %615 = vdwg.mxu0
      %v616 = vsel %vm247, %v614, -inf
      %v617 = vrot.slane %v616, 4
      %v618 = vmax.f32 %v616, %v617
      %v619 = vrot.slane %v618, 2
      %v620 = vmax.f32 %v618, %v619
      %v621 = vrot.slane %v620, 1
      %v622 = vmax.f32 %v620, %v621
      %v623 = vsub.f32 %v614, %v622
      %v624 = vmul.f32 %v623, 1.442695
      %v625 = vpow.pop %v624
      %v626 = vsel %vm247, %v625, 0.0
      %v627 = vrot.slane %v626, 4
      %v628 = vadd.f32 %v626, %v627
      %v629 = vrot.slane %v628, 2
      %v630 = vadd.f32 %v628, %v629
      %v631 = vrot.slane %v630, 1
      %v632 = vadd.f32 %v630, %v631
      %v634 = vsel %vm247, %v560, 0
      %636 = vmatpush.msra.mxu0 0.0
      %637 = vmatpush.msra.mxu0 0.0
      %638 = vmatpush.msra.mxu0 0.0
      %639 = vmatpush.msra.mxu0 0.0
      %640 = vmatpush.msra.mxu0 0.0
      %641 = vmatpush.msra.mxu0 0.0
      %642 = vmatpush.msra.mxu0 0.0
      %643 = vmatpush.msra.mxu0 0.0
      %644 = vmatpush.msra.mxu0 0.0
      %645 = vmatpush.msra.mxu0 0.0
      %646 = vmatpush.msra.mxu0 0.0
      %647 = vmatpush.msra.mxu0 0.0
      %648 = vmatpush.msra.mxu0 0.0
      %649 = vmatpush.msra.mxu0 0.0
      %650 = vmatpush.msra.mxu0 0.0
      %651 = vmatpush.msra.mxu0 %v625
      %652 = vmatmul.f32.gmra.mxu0 %v634
      %v653 = vpop.f32.mrf.mxu0
      %v654 = vadd.f32 0.0, %v653
      %655 = vdwg.mxu0
      %v656 = vrcp.pop %v632
      %v657 = vmul.f32 %v632, %v656
      %v658 = vsub.f32 1.0, %v657
      %v659 = vmul.f32 %v656, %v658
      %v660 = vadd.f32 %v656, %v659
      %vm661 = vweird.f32 %v632
      %vm662 = vweird.f32 %v656
      %vm663 = vmor %vm661, %vm662
      %v664 = vsel %vm663, %v656, %v660
      %v665 = vand.u32 2147483647, %v632
      %vm666 = vcmp.eq.f32.partialorder %v665, 8.507059e+37
      %v667 = vand.u32 %v632, 2147483648
      %v668 = vor.u32 1.1754944e-38, %v667
      %v669 = vsel %vm666, %v668, %v664
      %v670 = vmul.f32 %v654, %v669
      %671 = vst.msk [vmem:[%s210 + $0x18] sm:$0xff] %vm247, %v670
      %p672 = scmp.lt.s32.totalorder %s14, 1
      %s673 = scalar_select %p672, %s14, 1
      %s674 = smul.addr %s673, 4
      %s675 = smul.addr %s674, 8
      %s676 = scalar_lea.vmem %s3, %s675
      // Predicated region
      $region33: #{tpu_custom_call.1} parent=31 // pred_check
        %p677 = pneg %p110
      $region34: #{tpu_custom_call.1} parent=31 // pred_check_branch
        %679 = sbr.rel (%p677) target = $region36
      $region35: #{tpu_custom_call.1} parent=31 // pred_region
        _
      $region36: #{tpu_custom_call.1} parent=31 // pred_fallthru
        _
    $region32: #{tpu_custom_call.1} parent=5 // pred_fallthru
      _
    %p680 = scmp.le.s32.totalorder 2, %s9
    // Predicated region
    $region37: #{tpu_custom_call.1} parent=5 // pred_check
      %p681 = pneg %p680
    $region38: #{tpu_custom_call.1} parent=5 // pred_check_branch
      %683 = sbr.rel (%p681) target = $region40
    $region39: #{tpu_custom_call.1} parent=5 // pred_region
      %s684 = ssub.s32 %s9, 2
      // Predicated region
      $region41: #{tpu_custom_call.1} parent=39 // pred_check
        %p685 = pneg %p116
      $region42: #{tpu_custom_call.1} parent=39 // pred_check_branch
        %687 = sbr.rel (%p685) target = $region44
      $region43: #{tpu_custom_call.1} parent=39 // pred_region
        %p688 = scmp.lt.s32.totalorder %s15, 1
        %s689 = scalar_select %p688, %s15, 1
        %s690 = smul.addr %s689, 4
        %s691 = smul.addr %s690, 8
        %s692 = scalar_lea.vmem %s3, %s691
      $region44: #{tpu_custom_call.1} parent=39 // pred_fallthru
        _
    $region40: #{tpu_custom_call.1} parent=5 // pred_fallthru
      _
  $region6: #{tpu_custom_call.1} parent=0 // loop_footer
    %s13 = sadd.s32 1, %s9
  $region7: #{tpu_custom_call.1} parent=0 // loop_footer_branch
    %8 = sbr.rel target = $region3
  $region8: #{tpu_custom_call.1} parent=0 // loop_exit
    _

</llo_original>
